<compile_context>
chip_gen: v7x
topology: tpu7x:2x2x1
jax: 0.10.0
libtpu: 0.0.40
codegen_flags: <defaults>
</compile_context>

<pallas_src>
import functools

import jax
import jax.numpy as jnp
from jax.experimental import pallas as pl
from jax.experimental.pallas import tpu as pltpu


def _round_up(x: int, m: int) -> int:
    return ((x + m - 1) // m) * m


def _vmem_capacity_bytes(default: int = 64 << 20) -> int:
    """VMEM capacity of the local chip; conservative 64 MiB (v7x) fallback."""
    try:
        info = pltpu.get_tpu_info()
        cap = int(getattr(info, "vmem_capacity_bytes", 0))
        return cap if cap > 0 else default
    except Exception:
        return default


def _discriminator_kernel(ws_ref, f_ref, o_ref, *, precision):
    """One N-tile of scores = features @ ws.

    ws_ref : (H, 1)  f32      -- resident across all grid steps
    f_ref  : (TM, H) f32/bf16 -- streamed, double-buffered feature tile
    o_ref  : (TM, 1)          -- per-tile scores

    Width-1 MXU matvec with f32 accumulation; bf16 features feed the MXU
    directly (no VPU upcast pass), f32 features use HIGHEST precision so the
    MXU does not round inputs to bf16.
    """
    o_ref[...] = jnp.dot(
        f_ref[...],
        ws_ref[...],
        preferred_element_type=jnp.float32,
        precision=precision,
    ).astype(o_ref.dtype)


def discriminator_forward(features, weight, summary, *, target_tile_bytes=4 << 20):
    """features: (N, H), weight: (H, H), summary: (H,) -> scores: (N,).

    Matches torch: features @ (weight @ summary), f32 accumulation.
    bf16 features are supported (halves the dominant HBM stream on v5e/v6e).
    """
    N, H = features.shape
    assert weight.shape == (H, H)
    assert summary.shape == (H,)

    out_dtype = jnp.result_type(features.dtype, weight.dtype, summary.dtype)
    feat_itemsize = jnp.dtype(features.dtype).itemsize
    out_itemsize = jnp.dtype(out_dtype).itemsize

    # Hoisted bilinear projection: a single O(H^2) matvec in plain JAX.  Kept
    # as an (H, 1) f32 column so the kernel's matvec hits the MXU directly.
    ws_col = jnp.dot(weight, summary,
                     preferred_element_type=jnp.float32).reshape(H, 1)
    ws_col = ws_col.astype(jnp.float32)

    # ---- Row-tile sizing -------------------------------------------------
    # Target ~target_tile_bytes per feature buffer so per-grid-step overhead
    # is negligible versus the tile's DMA time.
    n_pad_min = _round_up(N, 128)
    tm = _round_up(max(1, target_tile_bytes // max(1, H * feat_itemsize)), 128)

    # Cap the DOUBLE-buffered feature footprint against VMEM capacity (v7x
    # has only 64 MiB), leaving headroom for ws, outputs and compiler scratch.
    vmem_cap = _vmem_capacity_bytes()
    feat_budget = vmem_cap // 3
    tm_cap = max(128, (feat_budget // max(1, 2 * H * feat_itemsize)) // 128 * 128)

    tm = max(128, min(tm, tm_cap, n_pad_min))

    n_pad = _round_up(N, tm)
    if n_pad != N:
        # Zero rows contribute zero scores and are sliced off at the end.
        features = jnp.pad(features, ((0, n_pad - N), (0, 0)))
    grid_n = n_pad // tm

    # ---- VMEM limit: double-buffered tiles + resident ws, +25% headroom ----
    feat_bytes = 2 * tm * H * feat_itemsize
    out_bytes = 2 * tm * out_itemsize
    ws_bytes = 2 * H * 4
    vmem_limit = int((feat_bytes + out_bytes + ws_bytes) * 1.25) + (2 << 20)
    vmem_limit = int(min(vmem_cap, max(vmem_limit, 16 << 20)))

    # MXU default precision rounds f32 inputs to bf16; keep full accuracy for
    # f32 feature streams.  bf16 streams go to the MXU as-is.
    if jnp.dtype(features.dtype) == jnp.dtype(jnp.float32):
        precision = jax.lax.Precision.HIGHEST
    else:
        precision = jax.lax.Precision.DEFAULT

    kernel = functools.partial(_discriminator_kernel, precision=precision)

    out = pl.pallas_call(
        kernel,
        out_shape=jax.ShapeDtypeStruct((n_pad, 1), out_dtype),
        grid=(grid_n,),
        in_specs=[
            # ws: same block every step -> DMA'd once, stays resident in VMEM.
            pl.BlockSpec((H, 1), lambda i: (0, 0)),
            # features: streamed N-tiles, auto double-buffered by Pallas.
            pl.BlockSpec((tm, H), lambda i: (i, 0)),
        ],
        out_specs=pl.BlockSpec((tm, 1), lambda i: (i, 0)),
        compiler_params=pltpu.CompilerParams(
            dimension_semantics=("parallel",),
            vmem_limit_bytes=vmem_limit,
        ),
    )(ws_col, features)

    return out.reshape(n_pad)[:N]


def init_discriminator_weight(key, n_hidden, dtype=jnp.float32):
    # matches reset_parameters: uniform(-1/sqrt(H), 1/sqrt(H))
    bound = 1.0 / (n_hidden ** 0.5)
    return jax.random.uniform(
        key, (n_hidden, n_hidden), dtype=dtype, minval=-bound, maxval=bound
    )


if __name__ == "__main__":
    key = jax.random.PRNGKey(0)
    k_w, k_f, k_s = jax.random.split(key, 3)

    # Case 1: module-sized small shapes (n_hidden=32, 8 rows) -> padding path.
    N1, H1 = 8, 32
    w1 = init_discriminator_weight(k_w, H1)
    f1 = jax.random.normal(k_f, (N1, H1), dtype=jnp.float32)
    s1 = jax.random.normal(k_s, (H1,), dtype=jnp.float32)
    out1 = jax.block_until_ready(discriminator_forward(f1, w1, s1))
    ref1 = f1 @ (w1 @ s1)
    assert out1.shape == (N1,)
    assert jnp.allclose(out1, ref1, atol=1e-3, rtol=1e-3), "toy mismatch vs reference"

    # Case 2: multi-tile grid (small target tile to exercise the pipeline).
    N2, H2 = 1024, 128
    w2 = init_discriminator_weight(k_w, H2)
    f2 = jax.random.normal(k_f, (N2, H2), dtype=jnp.float32)
    s2 = jax.random.normal(k_s, (H2,), dtype=jnp.float32)
    out2 = jax.block_until_ready(
        discriminator_forward(f2, w2, s2, target_tile_bytes=128 * H2 * 4))
    ref2 = f2 @ (w2 @ s2)
    assert out2.shape == (N2,)
    assert jnp.allclose(out2, ref2, atol=1e-3, rtol=1e-3), "f32 mismatch vs reference"

    # Case 3: bf16 feature stream (halves dominant HBM traffic), f32 accumulate,
    # auto tile sizing (single big tile here).
    f2_bf16 = f2.astype(jnp.bfloat16)
    out3 = jax.block_until_ready(discriminator_forward(f2_bf16, w2, s2))
    ref3 = f2_bf16.astype(jnp.float32) @ (w2 @ s2)
    assert jnp.allclose(out3, ref3, atol=5e-2, rtol=5e-2), "bf16 mismatch vs reference"

    print("KERNEL_OK")
</pallas_src>

<mosaic_0001>
module attributes {stable_mosaic.version = 11 : i64} {
  func.func @_discriminator_kernel(%arg0: i32, %arg1: memref<32x1xf32, #tpu.memory_space<vmem>>, %arg2: memref<128x32xf32, #tpu.memory_space<vmem>>, %arg3: memref<128x1xf32, #tpu.memory_space<vmem>>) attributes {dimension_semantics = [#tpu.dimension_semantics<parallel>], iteration_bounds = array<i64: 1>, scalar_prefetch = 0 : i64, scratch_operands = 0 : i64, tpu.core_type = #tpu.core_type<tc>, window_params = [{pipeline_mode = #tpu.pipeline_mode<synchronous>, transform_indices = @transform_0, window_bounds = array<i64: 32, 1>}, {transform_indices = @transform_1, window_bounds = array<i64: 128, 32>}, {transform_indices = @transform_2, window_bounds = array<i64: 128, 1>}]} {
    %c0 = arith.constant 0 : index
    %c0_0 = arith.constant 0 : index
    %0 = vector.load %arg2[%c0, %c0_0] : memref<128x32xf32, #tpu.memory_space<vmem>>, vector<128x32xf32>
    %c0_1 = arith.constant 0 : index
    %c0_2 = arith.constant 0 : index
    %1 = vector.load %arg1[%c0_1, %c0_2] : memref<32x1xf32, #tpu.memory_space<vmem>>, vector<32x1xf32>
    %cst = arith.constant dense<0.000000e+00> : vector<128x1xf32>
    %2 = tpu.matmul %0, %1, %cst {dimension_numbers = #tpu.dot_dimension_numbers<[1], [0], [0], [1], [0, 0, 1, 1], [], []>, precision = #tpu.contract_precision<fp32>} : vector<128x32xf32>, vector<32x1xf32>, vector<128x1xf32> -> vector<128x1xf32>
    %c0_3 = arith.constant 0 : index
    %c0_4 = arith.constant 0 : index
    %3 = vector.load %arg3[%c0_3, %c0_4] : memref<128x1xf32, #tpu.memory_space<vmem>>, vector<128x1xf32>
    tpu.vector_store %arg3[%c0_3, %c0_4], %2 {strides = array<i32>} : memref<128x1xf32, #tpu.memory_space<vmem>>, vector<128x1xf32>,
    return
  }
  func.func @transform_0(%arg0: i32) -> (i32, i32) {
    %c0_i32 = arith.constant 0 : i32
    %c0_i32_0 = arith.constant 0 : i32
    %c0_i32_1 = arith.constant 0 : i32
    return %c0_i32, %c0_i32_0 : i32, i32
  }
  func.func @transform_1(%arg0: i32) -> (i32, i32) {
    %c0_i32 = arith.constant 0 : i32
    %c0_i32_0 = arith.constant 0 : i32
    return %arg0, %c0_i32 : i32, i32
  }
  func.func @transform_2(%arg0: i32) -> (i32, i32) {
    %c0_i32 = arith.constant 0 : i32
    %c0_i32_0 = arith.constant 0 : i32
    return %arg0, %c0_i32 : i32, i32
  }
}

</mosaic_0001>

<llo_original>
// kernel: tpu_custom_call.1
$region0: #{tpu_custom_call.1}
  #allocation0 [shape = 'u32[]', space=smem, size = 0x4, offset = 0x4, fixed_abs, tag = 'smem constant byte address 0x4 - core index']
  #allocation1 [shape = 'u32[144,128]{1,0:T(1,128)}', space=vmem, size = 0x12000, scoped, tag = 'internal scratch']
  %s0 = inlined_call_operand.vmem [shape: f32[32,1], index: 0, kind: input, shape index: {}]
  %s1 = inlined_call_operand.vmem [shape: f32[128,32], index: 1, kind: input, shape index: {}]
  %s2 = inlined_call_operand.vmem [shape: f32[128,1], index: 2, kind: output, shape index: {}]
  %s3 = sld [smem:[#allocation0]]
  $region18: #{tpu_custom_call.1} parent=0
    _
  %s5 = ssub.s32 1, %s3
  %s6 = scalar_select 0, %s5, %s3
  // Predicated region
  $region2: #{tpu_custom_call.1} parent=0 // pred_check
    _
  $region3: #{tpu_custom_call.1} parent=0 // pred_check_branch
    %8 = sbr.rel (0) target = $region5
  $region4: #{tpu_custom_call.1} parent=0 // pred_region
    _
  $region5: #{tpu_custom_call.1} parent=0 // pred_fallthru
    _
  // Predicated region
  $region6: #{tpu_custom_call.1} parent=0 // pred_check
    _
  $region7: #{tpu_custom_call.1} parent=0 // pred_check_branch
    %10 = sbr.rel (0) target = $region9
  $region8: #{tpu_custom_call.1} parent=0 // pred_region
    _
  $region9: #{tpu_custom_call.1} parent=0 // pred_fallthru
    _
  %v11 = vld [vmem:[%s1] sm:$0xff]
  %v12 = vld [vmem:[%s1 + $0x8] sm:$0xff]
  %v13 = vld [vmem:[%s1 + $0x10] sm:$0xff]
  %v14 = vld [vmem:[%s1 + $0x18] sm:$0xff]
  %v15 = vld [vmem:[%s1 + $0x20] sm:$0xff]
  %v16 = vld [vmem:[%s1 + $0x28] sm:$0xff]
  %v17 = vld [vmem:[%s1 + $0x30] sm:$0xff]
  %v18 = vld [vmem:[%s1 + $0x38] sm:$0xff]
  %v19 = vld [vmem:[%s1 + $0x40] sm:$0xff]
  %v20 = vld [vmem:[%s1 + $0x48] sm:$0xff]
  %v21 = vld [vmem:[%s1 + $0x50] sm:$0xff]
  %v22 = vld [vmem:[%s1 + $0x58] sm:$0xff]
  %v23 = vld [vmem:[%s1 + $0x60] sm:$0xff]
  %v24 = vld [vmem:[%s1 + $0x68] sm:$0xff]
  %v25 = vld [vmem:[%s1 + $0x70] sm:$0xff]
  %v26 = vld [vmem:[%s1 + $0x78] sm:$0xff]
  %v27 = vld [vmem:[%s0] sm:$0xff]
  %v28 = vld [vmem:[%s0 + $0x8] sm:$0xff]
  %v29 = vld [vmem:[%s0 + $0x10] sm:$0xff]
  %v30 = vld [vmem:[%s0 + $0x18] sm:$0xff]
  %vm31 = vcmask 261120
  %v33 = vsel %vm31, %v11, 0
  %v36 = vsel %vm31, %v12, 0
  %v39 = vsel %vm31, %v13, 0
  %v42 = vsel %vm31, %v14, 0
  %v45 = vsel %vm31, %v15, 0
  %v48 = vsel %vm31, %v16, 0
  %v51 = vsel %vm31, %v17, 0
  %v54 = vsel %vm31, %v18, 0
  %v57 = vsel %vm31, %v19, 0
  %v60 = vsel %vm31, %v20, 0
  %v63 = vsel %vm31, %v21, 0
  %v66 = vsel %vm31, %v22, 0
  %v69 = vsel %vm31, %v23, 0
  %v72 = vsel %vm31, %v24, 0
  %v75 = vsel %vm31, %v25, 0
  %v78 = vsel %vm31, %v26, 0
  %80 = vmatprep.subr.mxu0 0.0
  %v81 = vand.u32 %v27, 4294901760
  %82 = vmatpush1.msra.mxu0 %v81
  %83 = vmatprep.subr.mxu0 0.0
  %v84 = vand.u32 %v28, 4294901760
  %85 = vmatpush1.msra.mxu0 %v84
  %86 = vmatprep.subr.mxu0 0.0
  %v87 = vand.u32 %v29, 4294901760
  %88 = vmatpush1.msra.mxu0 %v87
  %89 = vmatprep.subr.mxu0 0.0
  %v90 = vand.u32 %v30, 4294901760
  %91 = vmatpush1.msra.mxu0 %v90
  %92 = vmatprep.subr.mxu0 0.0
  %93 = vmatpush1.msra.mxu0 0.0
  %94 = vmatprep.subr.mxu0 0.0
  %95 = vmatpush1.msra.mxu0 0.0
  %96 = vmatprep.subr.mxu0 0.0
  %97 = vmatpush1.msra.mxu0 0.0
  %98 = vmatprep.subr.mxu0 0.0
  %99 = vmatpush1.msra.mxu0 0.0
  %100 = vmatprep.subr.mxu0 0.0
  %101 = vmatpush1.msra.mxu0 0.0
  %102 = vmatprep.subr.mxu0 0.0
  %103 = vmatpush1.msra.mxu0 0.0
  %104 = vmatprep.subr.mxu0 0.0
  %105 = vmatpush1.msra.mxu0 0.0
  %106 = vmatprep.subr.mxu0 0.0
  %107 = vmatpush1.msra.mxu0 0.0
  %108 = vmatprep.subr.mxu0 0.0
  %109 = vmatpush1.msra.mxu0 0.0
  %110 = vmatprep.subr.mxu0 0.0
  %111 = vmatpush1.msra.mxu0 0.0
  %112 = vmatprep.subr.mxu0 0.0
  %113 = vmatpush1.msra.mxu0 0.0
  %114 = vmatprep.subr.mxu0 0.0
  %115 = vmatpush1.msra.mxu0 0.0
  %116 = vmatprep.subr.mxu0 0.0
  %117 = vmatpush1.msra.mxu0 0.0
  %118 = vmatprep.subr.mxu0 0.0
  %119 = vmatpush1.msra.mxu0 0.0
  %120 = vmatprep.subr.mxu0 0.0
  %121 = vmatpush1.msra.mxu0 0.0
  %122 = vmatprep.subr.mxu0 0.0
  %123 = vmatpush1.msra.mxu0 0.0
  %124 = vmatprep.subr.mxu0 0.0
  %125 = vmatpush1.msra.mxu0 0.0
  %126 = vmatprep.subr.mxu0 0.0
  %127 = vmatpush1.msra.mxu0 0.0
  %128 = vmatprep.subr.mxu0 0.0
  %129 = vmatpush1.msra.mxu0 0.0
  %130 = vmatprep.subr.mxu0 0.0
  %131 = vmatpush1.msra.mxu0 0.0
  %132 = vmatprep.subr.mxu0 0.0
  %133 = vmatpush1.msra.mxu0 0.0
  %134 = vmatprep.subr.mxu0 0.0
  %135 = vmatpush1.msra.mxu0 0.0
  %136 = vmatprep.subr.mxu0 0.0
  %137 = vmatpush1.msra.mxu0 0.0
  %138 = vmatprep.subr.mxu0 0.0
  %139 = vmatpush1.msra.mxu0 0.0
  %140 = vmatprep.subr.mxu0 0.0
  %141 = vmatpush1.msra.mxu0 0.0
  %142 = vmatprep.subr.mxu0 0.0
  %143 = vmatpush1.msra.mxu0 0.0
  %144 = vmatprep.subr.mxu0 0.0
  %145 = vmatpush1.msra.mxu0 0.0
  %146 = vmatprep.subr.mxu0 0.0
  %147 = vmatpush1.msra.mxu0 0.0
  %148 = vmatprep.mubr.f32.mxu0 0.0
  %v149 = vand.u32 %v33, 4294901760
  %v150 = vsub.f32 %v33, %v149
  %v151 = vand.u32 %v150, 4294901760
  %v152 = vsub.f32 %v150, %v151
  %v153 = vand.u32 %v152, 4294901760
  %154 = vmatmul.mubr.f32.gmra.mrb[0].mxu0 %v153
  %v155 = vpop.f32.mrb[0].mxu0
  %v156 = vadd.f32 0.0, %v155
  %v157 = vpop.f32.mrb[0].mxu0
  %158 = vmatprep.mubr.f32.mxu0 0.0
  %v159 = vand.u32 %v36, 4294901760
  %v160 = vsub.f32 %v36, %v159
  %v161 = vand.u32 %v160, 4294901760
  %v162 = vsub.f32 %v160, %v161
  %v163 = vand.u32 %v162, 4294901760
  %164 = vmatmul.mubr.f32.gmra.mrb[0].mxu0 %v163
  %v165 = vpop.f32.mrb[0].mxu0
  %v166 = vadd.f32 0.0, %v165
  %v167 = vpop.f32.mrb[0].mxu0
  %168 = vmatprep.mubr.f32.mxu0 0.0
  %v169 = vand.u32 %v39, 4294901760
  %v170 = vsub.f32 %v39, %v169
  %v171 = vand.u32 %v170, 4294901760
  %v172 = vsub.f32 %v170, %v171
  %v173 = vand.u32 %v172, 4294901760
  %174 = vmatmul.mubr.f32.gmra.mrb[0].mxu0 %v173
  %v175 = vpop.f32.mrb[0].mxu0
  %v176 = vadd.f32 0.0, %v175
  %v177 = vpop.f32.mrb[0].mxu0
  %178 = vmatprep.mubr.f32.mxu0 0.0
  %v179 = vand.u32 %v42, 4294901760
  %v180 = vsub.f32 %v42, %v179
  %v181 = vand.u32 %v180, 4294901760
  %v182 = vsub.f32 %v180, %v181
  %v183 = vand.u32 %v182, 4294901760
  %184 = vmatmul.mubr.f32.gmra.mrb[0].mxu0 %v183
  %v185 = vpop.f32.mrb[0].mxu0
  %v186 = vadd.f32 0.0, %v185
  %v187 = vpop.f32.mrb[0].mxu0
  %188 = vmatprep.mubr.f32.mxu0 0.0
  %v189 = vand.u32 %v45, 4294901760
  %v190 = vsub.f32 %v45, %v189
  %v191 = vand.u32 %v190, 4294901760
  %v192 = vsub.f32 %v190, %v191
  %v193 = vand.u32 %v192, 4294901760
  %194 = vmatmul.mubr.f32.gmra.mrb[0].mxu0 %v193
  %v195 = vpop.f32.mrb[0].mxu0
  %v196 = vadd.f32 0.0, %v195
  %v197 = vpop.f32.mrb[0].mxu0
  %198 = vmatprep.mubr.f32.mxu0 0.0
  %v199 = vand.u32 %v48, 4294901760
  %v200 = vsub.f32 %v48, %v199
  %v201 = vand.u32 %v200, 4294901760
  %v202 = vsub.f32 %v200, %v201
  %v203 = vand.u32 %v202, 4294901760
  %204 = vmatmul.mubr.f32.gmra.mrb[0].mxu0 %v203
  %v205 = vpop.f32.mrb[0].mxu0
  %v206 = vadd.f32 0.0, %v205
  %v207 = vpop.f32.mrb[0].mxu0
  %208 = vmatprep.mubr.f32.mxu0 0.0
  %v209 = vand.u32 %v51, 4294901760
  %v210 = vsub.f32 %v51, %v209
  %v211 = vand.u32 %v210, 4294901760
  %v212 = vsub.f32 %v210, %v211
  %v213 = vand.u32 %v212, 4294901760
  %214 = vmatmul.mubr.f32.gmra.mrb[0].mxu0 %v213
  %v215 = vpop.f32.mrb[0].mxu0
  %v216 = vadd.f32 0.0, %v215
  %v217 = vpop.f32.mrb[0].mxu0
  %218 = vmatprep.mubr.f32.mxu0 0.0
  %v219 = vand.u32 %v54, 4294901760
  %v220 = vsub.f32 %v54, %v219
  %v221 = vand.u32 %v220, 4294901760
  %v222 = vsub.f32 %v220, %v221
  %v223 = vand.u32 %v222, 4294901760
  %224 = vmatmul.mubr.f32.gmra.mrb[0].mxu0 %v223
  %v225 = vpop.f32.mrb[0].mxu0
  %v226 = vadd.f32 0.0, %v225
  %v227 = vpop.f32.mrb[0].mxu0
  %228 = vmatprep.mubr.f32.mxu0 0.0
  %v229 = vand.u32 %v57, 4294901760
  %v230 = vsub.f32 %v57, %v229
  %v231 = vand.u32 %v230, 4294901760
  %v232 = vsub.f32 %v230, %v231
  %v233 = vand.u32 %v232, 4294901760
  %234 = vmatmul.mubr.f32.gmra.mrb[0].mxu0 %v233
  %v235 = vpop.f32.mrb[0].mxu0
  %v236 = vadd.f32 0.0, %v235
  %v237 = vpop.f32.mrb[0].mxu0
  %238 = vmatprep.mubr.f32.mxu0 0.0
  %v239 = vand.u32 %v60, 4294901760
  %v240 = vsub.f32 %v60, %v239
  %v241 = vand.u32 %v240, 4294901760
  %v242 = vsub.f32 %v240, %v241
  %v243 = vand.u32 %v242, 4294901760
  %244 = vmatmul.mubr.f32.gmra.mrb[0].mxu0 %v243
  %v245 = vpop.f32.mrb[0].mxu0
  %v246 = vadd.f32 0.0, %v245
  %v247 = vpop.f32.mrb[0].mxu0
  %248 = vmatprep.mubr.f32.mxu0 0.0
  %v249 = vand.u32 %v63, 4294901760
  %v250 = vsub.f32 %v63, %v249
  %v251 = vand.u32 %v250, 4294901760
  %v252 = vsub.f32 %v250, %v251
  %v253 = vand.u32 %v252, 4294901760
  %254 = vmatmul.mubr.f32.gmra.mrb[0].mxu0 %v253
  %v255 = vpop.f32.mrb[0].mxu0
  %v256 = vadd.f32 0.0, %v255
  %v257 = vpop.f32.mrb[0].mxu0
  %258 = vmatprep.mubr.f32.mxu0 0.0
  %v259 = vand.u32 %v66, 4294901760
  %v260 = vsub.f32 %v66, %v259
  %v261 = vand.u32 %v260, 4294901760
  %v262 = vsub.f32 %v260, %v261
  %v263 = vand.u32 %v262, 4294901760
  %264 = vmatmul.mubr.f32.gmra.mrb[0].mxu0 %v263
  %v265 = vpop.f32.mrb[0].mxu0
  %v266 = vadd.f32 0.0, %v265
  %v267 = vpop.f32.mrb[0].mxu0
  %268 = vmatprep.mubr.f32.mxu0 0.0
  %v269 = vand.u32 %v69, 4294901760
  %v270 = vsub.f32 %v69, %v269
  %v271 = vand.u32 %v270, 4294901760
  %v272 = vsub.f32 %v270, %v271
  %v273 = vand.u32 %v272, 4294901760
  %274 = vmatmul.mubr.f32.gmra.mrb[0].mxu0 %v273
  %v275 = vpop.f32.mrb[0].mxu0
  %v276 = vadd.f32 0.0, %v275
  %v277 = vpop.f32.mrb[0].mxu0
  %278 = vmatprep.mubr.f32.mxu0 0.0
  %v279 = vand.u32 %v72, 4294901760
  %v280 = vsub.f32 %v72, %v279
  %v281 = vand.u32 %v280, 4294901760
  %v282 = vsub.f32 %v280, %v281
  %v283 = vand.u32 %v282, 4294901760
  %284 = vmatmul.mubr.f32.gmra.mrb[0].mxu0 %v283
  %v285 = vpop.f32.mrb[0].mxu0
  %v286 = vadd.f32 0.0, %v285
  %v287 = vpop.f32.mrb[0].mxu0
  %288 = vmatprep.mubr.f32.mxu0 0.0
  %v289 = vand.u32 %v75, 4294901760
  %v290 = vsub.f32 %v75, %v289
  %v291 = vand.u32 %v290, 4294901760
  %v292 = vsub.f32 %v290, %v291
  %v293 = vand.u32 %v292, 4294901760
  %294 = vmatmul.mubr.f32.gmra.mrb[0].mxu0 %v293
  %v295 = vpop.f32.mrb[0].mxu0
  %v296 = vadd.f32 0.0, %v295
  %v297 = vpop.f32.mrb[0].mxu0
  %298 = vmatprep.mubr.f32.mxu0 0.0
  %v299 = vand.u32 %v78, 4294901760
  %v300 = vsub.f32 %v78, %v299
  %v301 = vand.u32 %v300, 4294901760
  %v302 = vsub.f32 %v300, %v301
  %v303 = vand.u32 %v302, 4294901760
  %304 = vmatmul.mubr.f32.gmra.mrb[0].mxu0 %v303
  %v305 = vpop.f32.mrb[0].mxu0
  %v306 = vadd.f32 0.0, %v305
  %v307 = vpop.f32.mrb[0].mxu0
  %308 = vdwg.mxu0
  %309 = vmatprep.subr.mxu0 0.0
  %v310 = vand.u32 %v27, 4294901760
  %v311 = vsub.f32 %v27, %v310
  %v312 = vand.u32 %v311, 4294901760
  %v313 = vsub.f32 %v311, %v312
  %v314 = vand.u32 %v313, 4294901760
  %315 = vmatpush1.msra.mxu0 %v314
  %316 = vmatprep.subr.mxu0 0.0
  %v317 = vand.u32 %v28, 4294901760
  %v318 = vsub.f32 %v28, %v317
  %v319 = vand.u32 %v318, 4294901760
  %v320 = vsub.f32 %v318, %v319
  %v321 = vand.u32 %v320, 4294901760
  %322 = vmatpush1.msra.mxu0 %v321
  %323 = vmatprep.subr.mxu0 0.0
  %v324 = vand.u32 %v29, 4294901760
  %v325 = vsub.f32 %v29, %v324
  %v326 = vand.u32 %v325, 4294901760
  %v327 = vsub.f32 %v325, %v326
  %v328 = vand.u32 %v327, 4294901760
  %329 = vmatpush1.msra.mxu0 %v328
  %330 = vmatprep.subr.mxu0 0.0
  %v331 = vand.u32 %v30, 4294901760
  %v332 = vsub.f32 %v30, %v331
  %v333 = vand.u32 %v332, 4294901760
  %v334 = vsub.f32 %v332, %v333
  %v335 = vand.u32 %v334, 4294901760
  %336 = vmatpush1.msra.mxu0 %v335
  %337 = vmatprep.subr.mxu0 0.0
  %338 = vmatpush1.msra.mxu0 0.0
  %339 = vmatprep.subr.mxu0 0.0
  %340 = vmatpush1.msra.mxu0 0.0
  %341 = vmatprep.subr.mxu0 0.0
  %342 = vmatpush1.msra.mxu0 0.0
  %343 = vmatprep.subr.mxu0 0.0
  %344 = vmatpush1.msra.mxu0 0.0
  %345 = vmatprep.subr.mxu0 0.0
  %346 = vmatpush1.msra.mxu0 0.0
  %347 = vmatprep.subr.mxu0 0.0
  %348 = vmatpush1.msra.mxu0 0.0
  %349 = vmatprep.subr.mxu0 0.0
  %350 = vmatpush1.msra.mxu0 0.0
  %351 = vmatprep.subr.mxu0 0.0
  %352 = vmatpush1.msra.mxu0 0.0
  %353 = vmatprep.subr.mxu0 0.0
  %354 = vmatpush1.msra.mxu0 0.0
  %355 = vmatprep.subr.mxu0 0.0
  %356 = vmatpush1.msra.mxu0 0.0
  %357 = vmatprep.subr.mxu0 0.0
  %358 = vmatpush1.msra.mxu0 0.0
  %359 = vmatprep.subr.mxu0 0.0
  %360 = vmatpush1.msra.mxu0 0.0
  %361 = vmatprep.subr.mxu0 0.0
  %362 = vmatpush1.msra.mxu0 0.0
  %363 = vmatprep.subr.mxu0 0.0
  %364 = vmatpush1.msra.mxu0 0.0
  %365 = vmatprep.subr.mxu0 0.0
  %366 = vmatpush1.msra.mxu0 0.0
  %367 = vmatprep.subr.mxu0 0.0
  %368 = vmatpush1.msra.mxu0 0.0
  %369 = vmatprep.subr.mxu0 0.0
  %370 = vmatpush1.msra.mxu0 0.0
  %371 = vmatprep.subr.mxu0 0.0
  %372 = vmatpush1.msra.mxu0 0.0
  %373 = vmatprep.subr.mxu0 0.0
  %374 = vmatpush1.msra.mxu0 0.0
  %375 = vmatprep.subr.mxu0 0.0
  %376 = vmatpush1.msra.mxu0 0.0
  %377 = vmatprep.subr.mxu0 0.0
  %378 = vmatpush1.msra.mxu0 0.0
  %379 = vmatprep.subr.mxu0 0.0
  %380 = vmatpush1.msra.mxu0 0.0
  %381 = vmatprep.subr.mxu0 0.0
  %382 = vmatpush1.msra.mxu0 0.0
  %383 = vmatprep.subr.mxu0 0.0
  %384 = vmatpush1.msra.mxu0 0.0
  %385 = vmatprep.subr.mxu0 0.0
  %386 = vmatpush1.msra.mxu0 0.0
  %387 = vmatprep.subr.mxu0 0.0
  %388 = vmatpush1.msra.mxu0 0.0
  %389 = vmatprep.subr.mxu0 0.0
  %390 = vmatpush1.msra.mxu0 0.0
  %391 = vmatprep.subr.mxu0 0.0
  %392 = vmatpush1.msra.mxu0 0.0
  %393 = vmatprep.mubr.f32.mxu0 0.0
  %v394 = vand.u32 %v33, 4294901760
  %395 = vmatmul.mubr.f32.gmra.mrb[0].mxu0 %v394
  %v396 = vpop.f32.mrb[0].mxu0
  %v397 = vadd.f32 %v156, %v396
  %v398 = vpop.f32.mrb[0].mxu0
  %399 = vmatprep.mubr.f32.mxu0 0.0
  %v400 = vand.u32 %v36, 4294901760
  %401 = vmatmul.mubr.f32.gmra.mrb[0].mxu0 %v400
  %v402 = vpop.f32.mrb[0].mxu0
  %v403 = vadd.f32 %v166, %v402
  %v404 = vpop.f32.mrb[0].mxu0
  %405 = vmatprep.mubr.f32.mxu0 0.0
  %v406 = vand.u32 %v39, 4294901760
  %407 = vmatmul.mubr.f32.gmra.mrb[0].mxu0 %v406
  %v408 = vpop.f32.mrb[0].mxu0
  %v409 = vadd.f32 %v176, %v408
  %v410 = vpop.f32.mrb[0].mxu0
  %411 = vmatprep.mubr.f32.mxu0 0.0
  %v412 = vand.u32 %v42, 4294901760
  %413 = vmatmul.mubr.f32.gmra.mrb[0].mxu0 %v412
  %v414 = vpop.f32.mrb[0].mxu0
  %v415 = vadd.f32 %v186, %v414
  %v416 = vpop.f32.mrb[0].mxu0
  %417 = vmatprep.mubr.f32.mxu0 0.0
  %v418 = vand.u32 %v45, 4294901760
  %419 = vmatmul.mubr.f32.gmra.mrb[0].mxu0 %v418
  %v420 = vpop.f32.mrb[0].mxu0
  %v421 = vadd.f32 %v196, %v420
  %v422 = vpop.f32.mrb[0].mxu0
  %423 = vmatprep.mubr.f32.mxu0 0.0
  %v424 = vand.u32 %v48, 4294901760
  %425 = vmatmul.mubr.f32.gmra.mrb[0].mxu0 %v424
  %v426 = vpop.f32.mrb[0].mxu0
  %v427 = vadd.f32 %v206, %v426
  %v428 = vpop.f32.mrb[0].mxu0
  %429 = vmatprep.mubr.f32.mxu0 0.0
  %v430 = vand.u32 %v51, 4294901760
  %431 = vmatmul.mubr.f32.gmra.mrb[0].mxu0 %v430
  %v432 = vpop.f32.mrb[0].mxu0
  %v433 = vadd.f32 %v216, %v432
  %v434 = vpop.f32.mrb[0].mxu0
  %435 = vmatprep.mubr.f32.mxu0 0.0
  %v436 = vand.u32 %v54, 4294901760
  %437 = vmatmul.mubr.f32.gmra.mrb[0].mxu0 %v436
  %v438 = vpop.f32.mrb[0].mxu0
  %v439 = vadd.f32 %v226, %v438
  %v440 = vpop.f32.mrb[0].mxu0
  %441 = vmatprep.mubr.f32.mxu0 0.0
  %v442 = vand.u32 %v57, 4294901760
  %443 = vmatmul.mubr.f32.gmra.mrb[0].mxu0 %v442
  %v444 = vpop.f32.mrb[0].mxu0
  %v445 = vadd.f32 %v236, %v444
  %v446 = vpop.f32.mrb[0].mxu0
  %447 = vmatprep.mubr.f32.mxu0 0.0
  %v448 = vand.u32 %v60, 4294901760
  %449 = vmatmul.mubr.f32.gmra.mrb[0].mxu0 %v448
  %v450 = vpop.f32.mrb[0].mxu0
  %v451 = vadd.f32 %v246, %v450
  %v452 = vpop.f32.mrb[0].mxu0
  %453 = vmatprep.mubr.f32.mxu0 0.0
  %v454 = vand.u32 %v63, 4294901760
  %455 = vmatmul.mubr.f32.gmra.mrb[0].mxu0 %v454
  %v456 = vpop.f32.mrb[0].mxu0
  %v457 = vadd.f32 %v256, %v456
  %v458 = vpop.f32.mrb[0].mxu0
  %459 = vmatprep.mubr.f32.mxu0 0.0
  %v460 = vand.u32 %v66, 4294901760
  %461 = vmatmul.mubr.f32.gmra.mrb[0].mxu0 %v460
  %v462 = vpop.f32.mrb[0].mxu0
  %v463 = vadd.f32 %v266, %v462
  %v464 = vpop.f32.mrb[0].mxu0
  %465 = vmatprep.mubr.f32.mxu0 0.0
  %v466 = vand.u32 %v69, 4294901760
  %467 = vmatmul.mubr.f32.gmra.mrb[0].mxu0 %v466
  %v468 = vpop.f32.mrb[0].mxu0
  %v469 = vadd.f32 %v276, %v468
  %v470 = vpop.f32.mrb[0].mxu0
  %471 = vmatprep.mubr.f32.mxu0 0.0
  %v472 = vand.u32 %v72, 4294901760
  %473 = vmatmul.mubr.f32.gmra.mrb[0].mxu0 %v472
  %v474 = vpop.f32.mrb[0].mxu0
  %v475 = vadd.f32 %v286, %v474
  %v476 = vpop.f32.mrb[0].mxu0
  %477 = vmatprep.mubr.f32.mxu0 0.0
  %v478 = vand.u32 %v75, 4294901760
  %479 = vmatmul.mubr.f32.gmra.mrb[0].mxu0 %v478
  %v480 = vpop.f32.mrb[0].mxu0
  %v481 = vadd.f32 %v296, %v480
  %v482 = vpop.f32.mrb[0].mxu0
  %483 = vmatprep.mubr.f32.mxu0 0.0
  %v484 = vand.u32 %v78, 4294901760
  %485 = vmatmul.mubr.f32.gmra.mrb[0].mxu0 %v484
  %v486 = vpop.f32.mrb[0].mxu0
  %v487 = vadd.f32 %v306, %v486
  %v488 = vpop.f32.mrb[0].mxu0
  %489 = vdwg.mxu0
  %490 = vmatprep.subr.mxu0 0.0
  %v491 = vand.u32 %v27, 4294901760
  %v492 = vsub.f32 %v27, %v491
  %493 = vmatpush1.msra.mxu0 %v492
  %494 = vmatprep.subr.mxu0 0.0
  %v495 = vand.u32 %v28, 4294901760
  %v496 = vsub.f32 %v28, %v495
  %497 = vmatpush1.msra.mxu0 %v496
  %498 = vmatprep.subr.mxu0 0.0
  %v499 = vand.u32 %v29, 4294901760
  %v500 = vsub.f32 %v29, %v499
  %501 = vmatpush1.msra.mxu0 %v500
  %502 = vmatprep.subr.mxu0 0.0
  %v503 = vand.u32 %v30, 4294901760
  %v504 = vsub.f32 %v30, %v503
  %505 = vmatpush1.msra.mxu0 %v504
  %506 = vmatprep.subr.mxu0 0.0
  %507 = vmatpush1.msra.mxu0 0.0
  %508 = vmatprep.subr.mxu0 0.0
  %509 = vmatpush1.msra.mxu0 0.0
  %510 = vmatprep.subr.mxu0 0.0
  %511 = vmatpush1.msra.mxu0 0.0
  %512 = vmatprep.subr.mxu0 0.0
  %513 = vmatpush1.msra.mxu0 0.0
  %514 = vmatprep.subr.mxu0 0.0
  %515 = vmatpush1.msra.mxu0 0.0
  %516 = vmatprep.subr.mxu0 0.0
  %517 = vmatpush1.msra.mxu0 0.0
  %518 = vmatprep.subr.mxu0 0.0
  %519 = vmatpush1.msra.mxu0 0.0
  %520 = vmatprep.subr.mxu0 0.0
  %521 = vmatpush1.msra.mxu0 0.0
  %522 = vmatprep.subr.mxu0 0.0
  %523 = vmatpush1.msra.mxu0 0.0
  %524 = vmatprep.subr.mxu0 0.0
  %525 = vmatpush1.msra.mxu0 0.0
  %526 = vmatprep.subr.mxu0 0.0
  %527 = vmatpush1.msra.mxu0 0.0
  %528 = vmatprep.subr.mxu0 0.0
  %529 = vmatpush1.msra.mxu0 0.0
  %530 = vmatprep.subr.mxu0 0.0
  %531 = vmatpush1.msra.mxu0 0.0
  %532 = vmatprep.subr.mxu0 0.0
  %533 = vmatpush1.msra.mxu0 0.0
  %534 = vmatprep.subr.mxu0 0.0
  %535 = vmatpush1.msra.mxu0 0.0
  %536 = vmatprep.subr.mxu0 0.0
  %537 = vmatpush1.msra.mxu0 0.0
  %538 = vmatprep.subr.mxu0 0.0
  %539 = vmatpush1.msra.mxu0 0.0
  %540 = vmatprep.subr.mxu0 0.0
  %541 = vmatpush1.msra.mxu0 0.0
  %542 = vmatprep.subr.mxu0 0.0
  %543 = vmatpush1.msra.mxu0 0.0
  %544 = vmatprep.subr.mxu0 0.0
  %545 = vmatpush1.msra.mxu0 0.0
  %546 = vmatprep.subr.mxu0 0.0
  %547 = vmatpush1.msra.mxu0 0.0
  %548 = vmatprep.subr.mxu0 0.0
  %549 = vmatpush1.msra.mxu0 0.0
  %550 = vmatprep.subr.mxu0 0.0
  %551 = vmatpush1.msra.mxu0 0.0
  %552 = vmatprep.subr.mxu0 0.0
  %553 = vmatpush1.msra.mxu0 0.0
  %554 = vmatprep.subr.mxu0 0.0
  %555 = vmatpush1.msra.mxu0 0.0
  %556 = vmatprep.subr.mxu0 0.0
  %557 = vmatpush1.msra.mxu0 0.0
  %558 = vmatprep.subr.mxu0 0.0
  %559 = vmatpush1.msra.mxu0 0.0
  %560 = vmatprep.subr.mxu0 0.0
  %561 = vmatpush1.msra.mxu0 0.0
  %562 = vmatprep.mubr.f32.mxu0 0.0
  %v563 = vand.u32 %v33, 4294901760
  %v564 = vsub.f32 %v33, %v563
  %565 = vmatmul.mubr.f32.gmra.mrb[0].mxu0 %v564
  %v566 = vpop.f32.mrb[0].mxu0
  %v567 = vadd.f32 %v397, %v566
  %v568 = vpop.f32.mrb[0].mxu0
  %569 = vmatprep.mubr.f32.mxu0 0.0
  %v570 = vand.u32 %v36, 4294901760
  %v571 = vsub.f32 %v36, %v570
  %572 = vmatmul.mubr.f32.gmra.mrb[0].mxu0 %v571
  %v573 = vpop.f32.mrb[0].mxu0
  %v574 = vadd.f32 %v403, %v573
  %v575 = vpop.f32.mrb[0].mxu0
  %576 = vmatprep.mubr.f32.mxu0 0.0
  %v577 = vand.u32 %v39, 4294901760
  %v578 = vsub.f32 %v39, %v577
  %579 = vmatmul.mubr.f32.gmra.mrb[0].mxu0 %v578
  %v580 = vpop.f32.mrb[0].mxu0
  %v581 = vadd.f32 %v409, %v580
  %v582 = vpop.f32.mrb[0].mxu0
  %583 = vmatprep.mubr.f32.mxu0 0.0
  %v584 = vand.u32 %v42, 4294901760
  %v585 = vsub.f32 %v42, %v584
  %586 = vmatmul.mubr.f32.gmra.mrb[0].mxu0 %v585
  %v587 = vpop.f32.mrb[0].mxu0
  %v588 = vadd.f32 %v415, %v587
  %v589 = vpop.f32.mrb[0].mxu0
  %590 = vmatprep.mubr.f32.mxu0 0.0
  %v591 = vand.u32 %v45, 4294901760
  %v592 = vsub.f32 %v45, %v591
  %593 = vmatmul.mubr.f32.gmra.mrb[0].mxu0 %v592
  %v594 = vpop.f32.mrb[0].mxu0
  %v595 = vadd.f32 %v421, %v594
  %v596 = vpop.f32.mrb[0].mxu0
  %597 = vmatprep.mubr.f32.mxu0 0.0
  %v598 = vand.u32 %v48, 4294901760
  %v599 = vsub.f32 %v48, %v598
  %600 = vmatmul.mubr.f32.gmra.mrb[0].mxu0 %v599
  %v601 = vpop.f32.mrb[0].mxu0
  %v602 = vadd.f32 %v427, %v601
  %v603 = vpop.f32.mrb[0].mxu0
  %604 = vmatprep.mubr.f32.mxu0 0.0
  %v605 = vand.u32 %v51, 4294901760
  %v606 = vsub.f32 %v51, %v605
  %607 = vmatmul.mubr.f32.gmra.mrb[0].mxu0 %v606
  %v608 = vpop.f32.mrb[0].mxu0
  %v609 = vadd.f32 %v433, %v608
  %v610 = vpop.f32.mrb[0].mxu0
  %611 = vmatprep.mubr.f32.mxu0 0.0
  %v612 = vand.u32 %v54, 4294901760
  %v613 = vsub.f32 %v54, %v612
  %614 = vmatmul.mubr.f32.gmra.mrb[0].mxu0 %v613
  %v615 = vpop.f32.mrb[0].mxu0
  %v616 = vadd.f32 %v439, %v615
  %v617 = vpop.f32.mrb[0].mxu0
  %618 = vmatprep.mubr.f32.mxu0 0.0
  %v619 = vand.u32 %v57, 4294901760
  %v620 = vsub.f32 %v57, %v619
  %621 = vmatmul.mubr.f32.gmra.mrb[0].mxu0 %v620
  %v622 = vpop.f32.mrb[0].mxu0
  %v623 = vadd.f32 %v445, %v622
  %v624 = vpop.f32.mrb[0].mxu0
  %625 = vmatprep.mubr.f32.mxu0 0.0
  %v626 = vand.u32 %v60, 4294901760
  %v627 = vsub.f32 %v60, %v626
  %628 = vmatmul.mubr.f32.gmra.mrb[0].mxu0 %v627
  %v629 = vpop.f32.mrb[0].mxu0
  %v630 = vadd.f32 %v451, %v629
  %v631 = vpop.f32.mrb[0].mxu0
  %632 = vmatprep.mubr.f32.mxu0 0.0
  %v633 = vand.u32 %v63, 4294901760
  %v634 = vsub.f32 %v63, %v633
  %635 = vmatmul.mubr.f32.gmra.mrb[0].mxu0 %v634
  %v636 = vpop.f32.mrb[0].mxu0
  %v637 = vadd.f32 %v457, %v636
  %v638 = vpop.f32.mrb[0].mxu0
  %639 = vmatprep.mubr.f32.mxu0 0.0
  %v640 = vand.u32 %v66, 4294901760
  %v641 = vsub.f32 %v66, %v640
  %642 = vmatmul.mubr.f32.gmra.mrb[0].mxu0 %v641
  %v643 = vpop.f32.mrb[0].mxu0
  %v644 = vadd.f32 %v463, %v643
  %v645 = vpop.f32.mrb[0].mxu0
  %646 = vmatprep.mubr.f32.mxu0 0.0
  %v647 = vand.u32 %v69, 4294901760
  %v648 = vsub.f32 %v69, %v647
  %649 = vmatmul.mubr.f32.gmra.mrb[0].mxu0 %v648
  %v650 = vpop.f32.mrb[0].mxu0
  %v651 = vadd.f32 %v469, %v650
  %v652 = vpop.f32.mrb[0].mxu0
  %653 = vmatprep.mubr.f32.mxu0 0.0
  %v654 = vand.u32 %v72, 4294901760
  %v655 = vsub.f32 %v72, %v654
  %656 = vmatmul.mubr.f32.gmra.mrb[0].mxu0 %v655
  %v657 = vpop.f32.mrb[0].mxu0
  %v658 = vadd.f32 %v475, %v657
  %v659 = vpop.f32.mrb[0].mxu0
  %660 = vmatprep.mubr.f32.mxu0 0.0
  %v661 = vand.u32 %v75, 4294901760
  %v662 = vsub.f32 %v75, %v661
  %663 = vmatmul.mubr.f32.gmra.mrb[0].mxu0 %v662
  %v664 = vpop.f32.mrb[0].mxu0
  %v665 = vadd.f32 %v481, %v664
  %v666 = vpop.f32.mrb[0].mxu0
  %667 = vmatprep.mubr.f32.mxu0 0.0
  %v668 = vand.u32 %v78, 4294901760
  %v669 = vsub.f32 %v78, %v668
  %670 = vmatmul.mubr.f32.gmra.mrb[0].mxu0 %v669
  %v671 = vpop.f32.mrb[0].mxu0
  %v672 = vadd.f32 %v487, %v671
  %v673 = vpop.f32.mrb[0].mxu0
  %674 = vdwg.mxu0
  %675 = vmatprep.subr.mxu0 0.0
  %v676 = vand.u32 %v27, 4294901760
  %677 = vmatpush1.msra.mxu0 %v676
  %678 = vmatprep.subr.mxu0 0.0
  %v679 = vand.u32 %v28, 4294901760
  %680 = vmatpush1.msra.mxu0 %v679
  %681 = vmatprep.subr.mxu0 0.0
  %v682 = vand.u32 %v29, 4294901760
  %683 = vmatpush1.msra.mxu0 %v682
  %684 = vmatprep.subr.mxu0 0.0
  %v685 = vand.u32 %v30, 4294901760
  %686 = vmatpush1.msra.mxu0 %v685
  %687 = vmatprep.subr.mxu0 0.0
  %688 = vmatpush1.msra.mxu0 0.0
  %689 = vmatprep.subr.mxu0 0.0
  %690 = vmatpush1.msra.mxu0 0.0
  %691 = vmatprep.subr.mxu0 0.0
  %692 = vmatpush1.msra.mxu0 0.0
  %693 = vmatprep.subr.mxu0 0.0
  %694 = vmatpush1.msra.mxu0 0.0
  %695 = vmatprep.subr.mxu0 0.0
  %696 = vmatpush1.msra.mxu0 0.0
  %697 = vmatprep.subr.mxu0 0.0
  %698 = vmatpush1.msra.mxu0 0.0
  %699 = vmatprep.subr.mxu0 0.0
  %700 = vmatpush1.msra.mxu0 0.0
  %701 = vmatprep.subr.mxu0 0.0
  %702 = vmatpush1.msra.mxu0 0.0
  %703 = vmatprep.subr.mxu0 0.0
  %704 = vmatpush1.msra.mxu0 0.0
  %705 = vmatprep.subr.mxu0 0.0
  %706 = vmatpush1.msra.mxu0 0.0
  %707 = vmatprep.subr.mxu0 0.0
  %708 = vmatpush1.msra.mxu0 0.0
  %709 = vmatprep.subr.mxu0 0.0
  %710 = vmatpush1.msra.mxu0 0.0
  %711 = vmatprep.subr.mxu0 0.0
  %712 = vmatpush1.msra.mxu0 0.0
  %713 = vmatprep.subr.mxu0 0.0
  %714 = vmatpush1.msra.mxu0 0.0
  %715 = vmatprep.subr.mxu0 0.0
  %716 = vmatpush1.msra.mxu0 0.0
  %717 = vmatprep.subr.mxu0 0.0
  %718 = vmatpush1.msra.mxu0 0.0
  %719 = vmatprep.subr.mxu0 0.0
  %720 = vmatpush1.msra.mxu0 0.0
  %721 = vmatprep.subr.mxu0 0.0
  %722 = vmatpush1.msra.mxu0 0.0
  %723 = vmatprep.subr.mxu0 0.0
  %724 = vmatpush1.msra.mxu0 0.0
  %725 = vmatprep.subr.mxu0 0.0
  %726 = vmatpush1.msra.mxu0 0.0
  %727 = vmatprep.subr.mxu0 0.0
  %728 = vmatpush1.msra.mxu0 0.0
  %729 = vmatprep.subr.mxu0 0.0
  %730 = vmatpush1.msra.mxu0 0.0
  %731 = vmatprep.subr.mxu0 0.0
  %732 = vmatpush1.msra.mxu0 0.0
  %733 = vmatprep.subr.mxu0 0.0
  %734 = vmatpush1.msra.mxu0 0.0
  %735 = vmatprep.subr.mxu0 0.0
  %736 = vmatpush1.msra.mxu0 0.0
  %737 = vmatprep.subr.mxu0 0.0
  %738 = vmatpush1.msra.mxu0 0.0
  %739 = vmatprep.subr.mxu0 0.0
  %740 = vmatpush1.msra.mxu0 0.0
  %741 = vmatprep.subr.mxu0 0.0
  %742 = vmatpush1.msra.mxu0 0.0
  %743 = vmatprep.mubr.f32.mxu0 0.0
  %v744 = vand.u32 %v33, 4294901760
  %v745 = vsub.f32 %v33, %v744
  %v746 = vand.u32 %v745, 4294901760
  %747 = vmatmul.mubr.f32.gmra.mrb[0].mxu0 %v746
  %v748 = vpop.f32.mrb[0].mxu0
  %v749 = vadd.f32 %v567, %v748
  %v750 = vpop.f32.mrb[0].mxu0
  %751 = vmatprep.mubr.f32.mxu0 0.0
  %v752 = vand.u32 %v36, 4294901760
  %v753 = vsub.f32 %v36, %v752
  %v754 = vand.u32 %v753, 4294901760
  %755 = vmatmul.mubr.f32.gmra.mrb[0].mxu0 %v754
  %v756 = vpop.f32.mrb[0].mxu0
  %v757 = vadd.f32 %v574, %v756
  %v758 = vpop.f32.mrb[0].mxu0
  %759 = vmatprep.mubr.f32.mxu0 0.0
  %v760 = vand.u32 %v39, 4294901760
  %v761 = vsub.f32 %v39, %v760
  %v762 = vand.u32 %v761, 4294901760
  %763 = vmatmul.mubr.f32.gmra.mrb[0].mxu0 %v762
  %v764 = vpop.f32.mrb[0].mxu0
  %v765 = vadd.f32 %v581, %v764
  %v766 = vpop.f32.mrb[0].mxu0
  %767 = vmatprep.mubr.f32.mxu0 0.0
  %v768 = vand.u32 %v42, 4294901760
  %v769 = vsub.f32 %v42, %v768
  %v770 = vand.u32 %v769, 4294901760
  %771 = vmatmul.mubr.f32.gmra.mrb[0].mxu0 %v770
  %v772 = vpop.f32.mrb[0].mxu0
  %v773 = vadd.f32 %v588, %v772
  %v774 = vpop.f32.mrb[0].mxu0
  %775 = vmatprep.mubr.f32.mxu0 0.0
  %v776 = vand.u32 %v45, 4294901760
  %v777 = vsub.f32 %v45, %v776
  %v778 = vand.u32 %v777, 4294901760
  %779 = vmatmul.mubr.f32.gmra.mrb[0].mxu0 %v778
  %v780 = vpop.f32.mrb[0].mxu0
  %v781 = vadd.f32 %v595, %v780
  %v782 = vpop.f32.mrb[0].mxu0
  %783 = vmatprep.mubr.f32.mxu0 0.0
  %v784 = vand.u32 %v48, 4294901760
  %v785 = vsub.f32 %v48, %v784
  %v786 = vand.u32 %v785, 4294901760
  %787 = vmatmul.mubr.f32.gmra.mrb[0].mxu0 %v786
  %v788 = vpop.f32.mrb[0].mxu0
  %v789 = vadd.f32 %v602, %v788
  %v790 = vpop.f32.mrb[0].mxu0
  %791 = vmatprep.mubr.f32.mxu0 0.0
  %v792 = vand.u32 %v51, 4294901760
  %v793 = vsub.f32 %v51, %v792
  %v794 = vand.u32 %v793, 4294901760
  %795 = vmatmul.mubr.f32.gmra.mrb[0].mxu0 %v794
  %v796 = vpop.f32.mrb[0].mxu0
  %v797 = vadd.f32 %v609, %v796
  %v798 = vpop.f32.mrb[0].mxu0
  %799 = vmatprep.mubr.f32.mxu0 0.0
  %v800 = vand.u32 %v54, 4294901760
  %v801 = vsub.f32 %v54, %v800
  %v802 = vand.u32 %v801, 4294901760
  %803 = vmatmul.mubr.f32.gmra.mrb[0].mxu0 %v802
  %v804 = vpop.f32.mrb[0].mxu0
  %v805 = vadd.f32 %v616, %v804
  %v806 = vpop.f32.mrb[0].mxu0
  %807 = vmatprep.mubr.f32.mxu0 0.0
  %v808 = vand.u32 %v57, 4294901760
  %v809 = vsub.f32 %v57, %v808
  %v810 = vand.u32 %v809, 4294901760
  %811 = vmatmul.mubr.f32.gmra.mrb[0].mxu0 %v810
  %v812 = vpop.f32.mrb[0].mxu0
  %v813 = vadd.f32 %v623, %v812
  %v814 = vpop.f32.mrb[0].mxu0
  %815 = vmatprep.mubr.f32.mxu0 0.0
  %v816 = vand.u32 %v60, 4294901760
  %v817 = vsub.f32 %v60, %v816
  %v818 = vand.u32 %v817, 4294901760
  %819 = vmatmul.mubr.f32.gmra.mrb[0].mxu0 %v818
  %v820 = vpop.f32.mrb[0].mxu0
  %v821 = vadd.f32 %v630, %v820
  %v822 = vpop.f32.mrb[0].mxu0
  %823 = vmatprep.mubr.f32.mxu0 0.0
  %v824 = vand.u32 %v63, 4294901760
  %v825 = vsub.f32 %v63, %v824
  %v826 = vand.u32 %v825, 4294901760
  %827 = vmatmul.mubr.f32.gmra.mrb[0].mxu0 %v826
  %v828 = vpop.f32.mrb[0].mxu0
  %v829 = vadd.f32 %v637, %v828
  %v830 = vpop.f32.mrb[0].mxu0
  %831 = vmatprep.mubr.f32.mxu0 0.0
  %v832 = vand.u32 %v66, 4294901760
  %v833 = vsub.f32 %v66, %v832
  %v834 = vand.u32 %v833, 4294901760
  %835 = vmatmul.mubr.f32.gmra.mrb[0].mxu0 %v834
  %v836 = vpop.f32.mrb[0].mxu0
  %v837 = vadd.f32 %v644, %v836
  %v838 = vpop.f32.mrb[0].mxu0
  %839 = vmatprep.mubr.f32.mxu0 0.0
  %v840 = vand.u32 %v69, 4294901760
  %v841 = vsub.f32 %v69, %v840
  %v842 = vand.u32 %v841, 4294901760
  %843 = vmatmul.mubr.f32.gmra.mrb[0].mxu0 %v842
  %v844 = vpop.f32.mrb[0].mxu0
  %v845 = vadd.f32 %v651, %v844
  %v846 = vpop.f32.mrb[0].mxu0
  %847 = vmatprep.mubr.f32.mxu0 0.0
  %v848 = vand.u32 %v72, 4294901760
  %v849 = vsub.f32 %v72, %v848
  %v850 = vand.u32 %v849, 4294901760
  %851 = vmatmul.mubr.f32.gmra.mrb[0].mxu0 %v850
  %v852 = vpop.f32.mrb[0].mxu0
  %v853 = vadd.f32 %v658, %v852
  %v854 = vpop.f32.mrb[0].mxu0
  %855 = vmatprep.mubr.f32.mxu0 0.0
  %v856 = vand.u32 %v75, 4294901760
  %v857 = vsub.f32 %v75, %v856
  %v858 = vand.u32 %v857, 4294901760
  %859 = vmatmul.mubr.f32.gmra.mrb[0].mxu0 %v858
  %v860 = vpop.f32.mrb[0].mxu0
  %v861 = vadd.f32 %v665, %v860
  %v862 = vpop.f32.mrb[0].mxu0
  %863 = vmatprep.mubr.f32.mxu0 0.0
  %v864 = vand.u32 %v78, 4294901760
  %v865 = vsub.f32 %v78, %v864
  %v866 = vand.u32 %v865, 4294901760
  %867 = vmatmul.mubr.f32.gmra.mrb[0].mxu0 %v866
  %v868 = vpop.f32.mrb[0].mxu0
  %v869 = vadd.f32 %v672, %v868
  %v870 = vpop.f32.mrb[0].mxu0
  %871 = vdwg.mxu0
  %872 = vmatprep.subr.mxu0 0.0
  %v873 = vand.u32 %v27, 4294901760
  %v874 = vsub.f32 %v27, %v873
  %v875 = vand.u32 %v874, 4294901760
  %876 = vmatpush1.msra.mxu0 %v875
  %877 = vmatprep.subr.mxu0 0.0
  %v878 = vand.u32 %v28, 4294901760
  %v879 = vsub.f32 %v28, %v878
  %v880 = vand.u32 %v879, 4294901760
  %881 = vmatpush1.msra.mxu0 %v880
  %882 = vmatprep.subr.mxu0 0.0
  %v883 = vand.u32 %v29, 4294901760
  %v884 = vsub.f32 %v29, %v883
  %v885 = vand.u32 %v884, 4294901760
  %886 = vmatpush1.msra.mxu0 %v885
  %887 = vmatprep.subr.mxu0 0.0
  %v888 = vand.u32 %v30, 4294901760
  %v889 = vsub.f32 %v30, %v888
  %v890 = vand.u32 %v889, 4294901760
  %891 = vmatpush1.msra.mxu0 %v890
  %892 = vmatprep.subr.mxu0 0.0
  %893 = vmatpush1.msra.mxu0 0.0
  %894 = vmatprep.subr.mxu0 0.0
  %895 = vmatpush1.msra.mxu0 0.0
  %896 = vmatprep.subr.mxu0 0.0
  %897 = vmatpush1.msra.mxu0 0.0
  %898 = vmatprep.subr.mxu0 0.0
  %899 = vmatpush1.msra.mxu0 0.0
  %900 = vmatprep.subr.mxu0 0.0
  %901 = vmatpush1.msra.mxu0 0.0
  %902 = vmatprep.subr.mxu0 0.0
  %903 = vmatpush1.msra.mxu0 0.0
  %904 = vmatprep.subr.mxu0 0.0
  %905 = vmatpush1.msra.mxu0 0.0
  %906 = vmatprep.subr.mxu0 0.0
  %907 = vmatpush1.msra.mxu0 0.0
  %908 = vmatprep.subr.mxu0 0.0
  %909 = vmatpush1.msra.mxu0 0.0
  %910 = vmatprep.subr.mxu0 0.0
  %911 = vmatpush1.msra.mxu0 0.0
  %912 = vmatprep.subr.mxu0 0.0
  %913 = vmatpush1.msra.mxu0 0.0
  %914 = vmatprep.subr.mxu0 0.0
  %915 = vmatpush1.msra.mxu0 0.0
  %916 = vmatprep.subr.mxu0 0.0
  %917 = vmatpush1.msra.mxu0 0.0
  %918 = vmatprep.subr.mxu0 0.0
  %919 = vmatpush1.msra.mxu0 0.0
  %920 = vmatprep.subr.mxu0 0.0
  %921 = vmatpush1.msra.mxu0 0.0
  %922 = vmatprep.subr.mxu0 0.0
  %923 = vmatpush1.msra.mxu0 0.0
  %924 = vmatprep.subr.mxu0 0.0
  %925 = vmatpush1.msra.mxu0 0.0
  %926 = vmatprep.subr.mxu0 0.0
  %927 = vmatpush1.msra.mxu0 0.0
  %928 = vmatprep.subr.mxu0 0.0
  %929 = vmatpush1.msra.mxu0 0.0
  %930 = vmatprep.subr.mxu0 0.0
  %931 = vmatpush1.msra.mxu0 0.0
  %932 = vmatprep.subr.mxu0 0.0
  %933 = vmatpush1.msra.mxu0 0.0
  %934 = vmatprep.subr.mxu0 0.0
  %935 = vmatpush1.msra.mxu0 0.0
  %936 = vmatprep.subr.mxu0 0.0
  %937 = vmatpush1.msra.mxu0 0.0
  %938 = vmatprep.subr.mxu0 0.0
  %939 = vmatpush1.msra.mxu0 0.0
  %940 = vmatprep.subr.mxu0 0.0
  %941 = vmatpush1.msra.mxu0 0.0
  %942 = vmatprep.subr.mxu0 0.0
  %943 = vmatpush1.msra.mxu0 0.0
  %944 = vmatprep.subr.mxu0 0.0
  %945 = vmatpush1.msra.mxu0 0.0
  %946 = vmatprep.subr.mxu0 0.0
  %947 = vmatpush1.msra.mxu0 0.0
  %948 = vmatprep.mubr.f32.mxu0 0.0
  %v949 = vand.u32 %v33, 4294901760
  %950 = vmatmul.mubr.f32.gmra.mrb[0].mxu0 %v949
  %v951 = vpop.f32.mrb[0].mxu0
  %v952 = vadd.f32 %v749, %v951
  %v953 = vpop.f32.mrb[0].mxu0
  %954 = vmatprep.mubr.f32.mxu0 0.0
  %v955 = vand.u32 %v36, 4294901760
  %956 = vmatmul.mubr.f32.gmra.mrb[0].mxu0 %v955
  %v957 = vpop.f32.mrb[0].mxu0
  %v958 = vadd.f32 %v757, %v957
  %v959 = vpop.f32.mrb[0].mxu0
  %960 = vmatprep.mubr.f32.mxu0 0.0
  %v961 = vand.u32 %v39, 4294901760
  %962 = vmatmul.mubr.f32.gmra.mrb[0].mxu0 %v961
  %v963 = vpop.f32.mrb[0].mxu0
  %v964 = vadd.f32 %v765, %v963
  %v965 = vpop.f32.mrb[0].mxu0
  %966 = vmatprep.mubr.f32.mxu0 0.0
  %v967 = vand.u32 %v42, 4294901760
  %968 = vmatmul.mubr.f32.gmra.mrb[0].mxu0 %v967
  %v969 = vpop.f32.mrb[0].mxu0
  %v970 = vadd.f32 %v773, %v969
  %v971 = vpop.f32.mrb[0].mxu0
  %972 = vmatprep.mubr.f32.mxu0 0.0
  %v973 = vand.u32 %v45, 4294901760
  %974 = vmatmul.mubr.f32.gmra.mrb[0].mxu0 %v973
  %v975 = vpop.f32.mrb[0].mxu0
  %v976 = vadd.f32 %v781, %v975
  %v977 = vpop.f32.mrb[0].mxu0
  %978 = vmatprep.mubr.f32.mxu0 0.0
  %v979 = vand.u32 %v48, 4294901760
  %980 = vmatmul.mubr.f32.gmra.mrb[0].mxu0 %v979
  %v981 = vpop.f32.mrb[0].mxu0
  %v982 = vadd.f32 %v789, %v981
  %v983 = vpop.f32.mrb[0].mxu0
  %984 = vmatprep.mubr.f32.mxu0 0.0
  %v985 = vand.u32 %v51, 4294901760
  %986 = vmatmul.mubr.f32.gmra.mrb[0].mxu0 %v985
  %v987 = vpop.f32.mrb[0].mxu0
  %v988 = vadd.f32 %v797, %v987
  %v989 = vpop.f32.mrb[0].mxu0
  %990 = vmatprep.mubr.f32.mxu0 0.0
  %v991 = vand.u32 %v54, 4294901760
  %992 = vmatmul.mubr.f32.gmra.mrb[0].mxu0 %v991
  %v993 = vpop.f32.mrb[0].mxu0
  %v994 = vadd.f32 %v805, %v993
  %v995 = vpop.f32.mrb[0].mxu0
  %996 = vmatprep.mubr.f32.mxu0 0.0
  %v997 = vand.u32 %v57, 4294901760
  %998 = vmatmul.mubr.f32.gmra.mrb[0].mxu0 %v997
  %v999 = vpop.f32.mrb[0].mxu0
  %v1000 = vadd.f32 %v813, %v999
  %v1001 = vpop.f32.mrb[0].mxu0
  %1002 = vmatprep.mubr.f32.mxu0 0.0
  %v1003 = vand.u32 %v60, 4294901760
  %1004 = vmatmul.mubr.f32.gmra.mrb[0].mxu0 %v1003
  %v1005 = vpop.f32.mrb[0].mxu0
  %v1006 = vadd.f32 %v821, %v1005
  %v1007 = vpop.f32.mrb[0].mxu0
  %1008 = vmatprep.mubr.f32.mxu0 0.0
  %v1009 = vand.u32 %v63, 4294901760
  %1010 = vmatmul.mubr.f32.gmra.mrb[0].mxu0 %v1009
  %v1011 = vpop.f32.mrb[0].mxu0
  %v1012 = vadd.f32 %v829, %v1011
  %v1013 = vpop.f32.mrb[0].mxu0
  %1014 = vmatprep.mubr.f32.mxu0 0.0
  %v1015 = vand.u32 %v66, 4294901760
  %1016 = vmatmul.mubr.f32.gmra.mrb[0].mxu0 %v1015
  %v1017 = vpop.f32.mrb[0].mxu0
  %v1018 = vadd.f32 %v837, %v1017
  %v1019 = vpop.f32.mrb[0].mxu0
  %1020 = vmatprep.mubr.f32.mxu0 0.0
  %v1021 = vand.u32 %v69, 4294901760
  %1022 = vmatmul.mubr.f32.gmra.mrb[0].mxu0 %v1021
  %v1023 = vpop.f32.mrb[0].mxu0
  %v1024 = vadd.f32 %v845, %v1023
  %v1025 = vpop.f32.mrb[0].mxu0
  %1026 = vmatprep.mubr.f32.mxu0 0.0
  %v1027 = vand.u32 %v72, 4294901760
  %1028 = vmatmul.mubr.f32.gmra.mrb[0].mxu0 %v1027
  %v1029 = vpop.f32.mrb[0].mxu0
  %v1030 = vadd.f32 %v853, %v1029
  %v1031 = vpop.f32.mrb[0].mxu0
  %1032 = vmatprep.mubr.f32.mxu0 0.0
  %v1033 = vand.u32 %v75, 4294901760
  %1034 = vmatmul.mubr.f32.gmra.mrb[0].mxu0 %v1033
  %v1035 = vpop.f32.mrb[0].mxu0
  %v1036 = vadd.f32 %v861, %v1035
  %v1037 = vpop.f32.mrb[0].mxu0
  %1038 = vmatprep.mubr.f32.mxu0 0.0
  %v1039 = vand.u32 %v78, 4294901760
  %1040 = vmatmul.mubr.f32.gmra.mrb[0].mxu0 %v1039
  %v1041 = vpop.f32.mrb[0].mxu0
  %v1042 = vadd.f32 %v869, %v1041
  %v1043 = vpop.f32.mrb[0].mxu0
  %1044 = vdwg.mxu0
  %1045 = vmatprep.subr.mxu0 0.0
  %v1046 = vand.u32 %v27, 4294901760
  %1047 = vmatpush1.msra.mxu0 %v1046
  %1048 = vmatprep.subr.mxu0 0.0
  %v1049 = vand.u32 %v28, 4294901760
  %1050 = vmatpush1.msra.mxu0 %v1049
  %1051 = vmatprep.subr.mxu0 0.0
  %v1052 = vand.u32 %v29, 4294901760
  %1053 = vmatpush1.msra.mxu0 %v1052
  %1054 = vmatprep.subr.mxu0 0.0
  %v1055 = vand.u32 %v30, 4294901760
  %1056 = vmatpush1.msra.mxu0 %v1055
  %1057 = vmatprep.subr.mxu0 0.0
  %1058 = vmatpush1.msra.mxu0 0.0
  %1059 = vmatprep.subr.mxu0 0.0
  %1060 = vmatpush1.msra.mxu0 0.0
  %1061 = vmatprep.subr.mxu0 0.0
  %1062 = vmatpush1.msra.mxu0 0.0
  %1063 = vmatprep.subr.mxu0 0.0
  %1064 = vmatpush1.msra.mxu0 0.0
  %1065 = vmatprep.subr.mxu0 0.0
  %1066 = vmatpush1.msra.mxu0 0.0
  %1067 = vmatprep.subr.mxu0 0.0
  %1068 = vmatpush1.msra.mxu0 0.0
  %1069 = vmatprep.subr.mxu0 0.0
  %1070 = vmatpush1.msra.mxu0 0.0
  %1071 = vmatprep.subr.mxu0 0.0
  %1072 = vmatpush1.msra.mxu0 0.0
  %1073 = vmatprep.subr.mxu0 0.0
  %1074 = vmatpush1.msra.mxu0 0.0
  %1075 = vmatprep.subr.mxu0 0.0
  %1076 = vmatpush1.msra.mxu0 0.0
  %1077 = vmatprep.subr.mxu0 0.0
  %1078 = vmatpush1.msra.mxu0 0.0
  %1079 = vmatprep.subr.mxu0 0.0
  %1080 = vmatpush1.msra.mxu0 0.0
  %1081 = vmatprep.subr.mxu0 0.0
  %1082 = vmatpush1.msra.mxu0 0.0
  %1083 = vmatprep.subr.mxu0 0.0
  %1084 = vmatpush1.msra.mxu0 0.0
  %1085 = vmatprep.subr.mxu0 0.0
  %1086 = vmatpush1.msra.mxu0 0.0
  %1087 = vmatprep.subr.mxu0 0.0
  %1088 = vmatpush1.msra.mxu0 0.0
  %1089 = vmatprep.subr.mxu0 0.0
  %1090 = vmatpush1.msra.mxu0 0.0
  %1091 = vmatprep.subr.mxu0 0.0
  %1092 = vmatpush1.msra.mxu0 0.0
  %1093 = vmatprep.subr.mxu0 0.0
  %1094 = vmatpush1.msra.mxu0 0.0
  %1095 = vmatprep.subr.mxu0 0.0
  %1096 = vmatpush1.msra.mxu0 0.0
  %1097 = vmatprep.subr.mxu0 0.0
  %1098 = vmatpush1.msra.mxu0 0.0
  %1099 = vmatprep.subr.mxu0 0.0
  %1100 = vmatpush1.msra.mxu0 0.0
  %1101 = vmatprep.subr.mxu0 0.0
  %1102 = vmatpush1.msra.mxu0 0.0
  %1103 = vmatprep.subr.mxu0 0.0
  %1104 = vmatpush1.msra.mxu0 0.0
  %1105 = vmatprep.subr.mxu0 0.0
  %1106 = vmatpush1.msra.mxu0 0.0
  %1107 = vmatprep.subr.mxu0 0.0
  %1108 = vmatpush1.msra.mxu0 0.0
  %1109 = vmatprep.subr.mxu0 0.0
  %1110 = vmatpush1.msra.mxu0 0.0
  %1111 = vmatprep.subr.mxu0 0.0
  %1112 = vmatpush1.msra.mxu0 0.0
  %1113 = vmatprep.mubr.f32.mxu0 0.0
  %v1114 = vand.u32 %v33, 4294901760
  %1115 = vmatmul.mubr.f32.gmra.mrb[0].mxu0 %v1114
  %v1116 = vpop.f32.mrb[0].mxu0
  %v1117 = vadd.f32 %v952, %v1116
  %v1118 = vpop.f32.mrb[0].mxu0
  %1119 = vmatprep.mubr.f32.mxu0 0.0
  %v1120 = vand.u32 %v36, 4294901760
  %1121 = vmatmul.mubr.f32.gmra.mrb[0].mxu0 %v1120
  %v1122 = vpop.f32.mrb[0].mxu0
  %v1123 = vadd.f32 %v958, %v1122
  %v1124 = vpop.f32.mrb[0].mxu0
  %1125 = vmatprep.mubr.f32.mxu0 0.0
  %v1126 = vand.u32 %v39, 4294901760
  %1127 = vmatmul.mubr.f32.gmra.mrb[0].mxu0 %v1126
  %v1128 = vpop.f32.mrb[0].mxu0
  %v1129 = vadd.f32 %v964, %v1128
  %v1130 = vpop.f32.mrb[0].mxu0
  %1131 = vmatprep.mubr.f32.mxu0 0.0
  %v1132 = vand.u32 %v42, 4294901760
  %1133 = vmatmul.mubr.f32.gmra.mrb[0].mxu0 %v1132
  %v1134 = vpop.f32.mrb[0].mxu0
  %v1135 = vadd.f32 %v970, %v1134
  %v1136 = vpop.f32.mrb[0].mxu0
  %1137 = vmatprep.mubr.f32.mxu0 0.0
  %v1138 = vand.u32 %v45, 4294901760
  %1139 = vmatmul.mubr.f32.gmra.mrb[0].mxu0 %v1138
  %v1140 = vpop.f32.mrb[0].mxu0
  %v1141 = vadd.f32 %v976, %v1140
  %v1142 = vpop.f32.mrb[0].mxu0
  %1143 = vmatprep.mubr.f32.mxu0 0.0
  %v1144 = vand.u32 %v48, 4294901760
  %1145 = vmatmul.mubr.f32.gmra.mrb[0].mxu0 %v1144
  %v1146 = vpop.f32.mrb[0].mxu0
  %v1147 = vadd.f32 %v982, %v1146
  %v1148 = vpop.f32.mrb[0].mxu0
  %1149 = vmatprep.mubr.f32.mxu0 0.0
  %v1150 = vand.u32 %v51, 4294901760
  %1151 = vmatmul.mubr.f32.gmra.mrb[0].mxu0 %v1150
  %v1152 = vpop.f32.mrb[0].mxu0
  %v1153 = vadd.f32 %v988, %v1152
  %v1154 = vpop.f32.mrb[0].mxu0
  %1155 = vmatprep.mubr.f32.mxu0 0.0
  %v1156 = vand.u32 %v54, 4294901760
  %1157 = vmatmul.mubr.f32.gmra.mrb[0].mxu0 %v1156
  %v1158 = vpop.f32.mrb[0].mxu0
  %v1159 = vadd.f32 %v994, %v1158
  %v1160 = vpop.f32.mrb[0].mxu0
  %1161 = vmatprep.mubr.f32.mxu0 0.0
  %v1162 = vand.u32 %v57, 4294901760
  %1163 = vmatmul.mubr.f32.gmra.mrb[0].mxu0 %v1162
  %v1164 = vpop.f32.mrb[0].mxu0
  %v1165 = vadd.f32 %v1000, %v1164
  %v1166 = vpop.f32.mrb[0].mxu0
  %1167 = vmatprep.mubr.f32.mxu0 0.0
  %v1168 = vand.u32 %v60, 4294901760
  %1169 = vmatmul.mubr.f32.gmra.mrb[0].mxu0 %v1168
  %v1170 = vpop.f32.mrb[0].mxu0
  %v1171 = vadd.f32 %v1006, %v1170
  %v1172 = vpop.f32.mrb[0].mxu0
  %1173 = vmatprep.mubr.f32.mxu0 0.0
  %v1174 = vand.u32 %v63, 4294901760
  %1175 = vmatmul.mubr.f32.gmra.mrb[0].mxu0 %v1174
  %v1176 = vpop.f32.mrb[0].mxu0
  %v1177 = vadd.f32 %v1012, %v1176
  %v1178 = vpop.f32.mrb[0].mxu0
  %1179 = vmatprep.mubr.f32.mxu0 0.0
  %v1180 = vand.u32 %v66, 4294901760
  %1181 = vmatmul.mubr.f32.gmra.mrb[0].mxu0 %v1180
  %v1182 = vpop.f32.mrb[0].mxu0
  %v1183 = vadd.f32 %v1018, %v1182
  %v1184 = vpop.f32.mrb[0].mxu0
  %1185 = vmatprep.mubr.f32.mxu0 0.0
  %v1186 = vand.u32 %v69, 4294901760
  %1187 = vmatmul.mubr.f32.gmra.mrb[0].mxu0 %v1186
  %v1188 = vpop.f32.mrb[0].mxu0
  %v1189 = vadd.f32 %v1024, %v1188
  %v1190 = vpop.f32.mrb[0].mxu0
  %1191 = vmatprep.mubr.f32.mxu0 0.0
  %v1192 = vand.u32 %v72, 4294901760
  %1193 = vmatmul.mubr.f32.gmra.mrb[0].mxu0 %v1192
  %v1194 = vpop.f32.mrb[0].mxu0
  %v1195 = vadd.f32 %v1030, %v1194
  %v1196 = vpop.f32.mrb[0].mxu0
  %1197 = vmatprep.mubr.f32.mxu0 0.0
  %v1198 = vand.u32 %v75, 4294901760
  %1199 = vmatmul.mubr.f32.gmra.mrb[0].mxu0 %v1198
  %v1200 = vpop.f32.mrb[0].mxu0
  %v1201 = vadd.f32 %v1036, %v1200
  %v1202 = vpop.f32.mrb[0].mxu0
  %1203 = vmatprep.mubr.f32.mxu0 0.0
  %v1204 = vand.u32 %v78, 4294901760
  %1205 = vmatmul.mubr.f32.gmra.mrb[0].mxu0 %v1204
  %v1206 = vpop.f32.mrb[0].mxu0
  %v1207 = vadd.f32 %v1042, %v1206
  %v1208 = vpop.f32.mrb[0].mxu0
  %1209 = vdwg.mxu0
  %vm1210 = vcmask 7168
  %1211 = vst.msk [vmem:[%s2] sm:$0xff] %vm1210, %v1117
  %1212 = vst.msk [vmem:[%s2 + $0x8] sm:$0xff] %vm1210, %v1123
  %1213 = vst.msk [vmem:[%s2 + $0x10] sm:$0xff] %vm1210, %v1129
  %1214 = vst.msk [vmem:[%s2 + $0x18] sm:$0xff] %vm1210, %v1135
  %1215 = vst.msk [vmem:[%s2 + $0x20] sm:$0xff] %vm1210, %v1141
  %1216 = vst.msk [vmem:[%s2 + $0x28] sm:$0xff] %vm1210, %v1147
  %1217 = vst.msk [vmem:[%s2 + $0x30] sm:$0xff] %vm1210, %v1153
  %1218 = vst.msk [vmem:[%s2 + $0x38] sm:$0xff] %vm1210, %v1159
  %1219 = vst.msk [vmem:[%s2 + $0x40] sm:$0xff] %vm1210, %v1165
  %1220 = vst.msk [vmem:[%s2 + $0x48] sm:$0xff] %vm1210, %v1171
  %1221 = vst.msk [vmem:[%s2 + $0x50] sm:$0xff] %vm1210, %v1177
  %1222 = vst.msk [vmem:[%s2 + $0x58] sm:$0xff] %vm1210, %v1183
  %1223 = vst.msk [vmem:[%s2 + $0x60] sm:$0xff] %vm1210, %v1189
  %1224 = vst.msk [vmem:[%s2 + $0x68] sm:$0xff] %vm1210, %v1195
  %1225 = vst.msk [vmem:[%s2 + $0x70] sm:$0xff] %vm1210, %v1201
  %1226 = vst.msk [vmem:[%s2 + $0x78] sm:$0xff] %vm1210, %v1207
  // Predicated region
  $region10: #{tpu_custom_call.1} parent=0 // pred_check
    _
  $region11: #{tpu_custom_call.1} parent=0 // pred_check_branch
    %1228 = sbr.rel (0) target = $region13
  $region12: #{tpu_custom_call.1} parent=0 // pred_region
    _
  $region13: #{tpu_custom_call.1} parent=0 // pred_fallthru
    _
  // Predicated region
  $region14: #{tpu_custom_call.1} parent=0 // pred_check
    _
  $region15: #{tpu_custom_call.1} parent=0 // pred_check_branch
    %1230 = sbr.rel (0) target = $region17
  $region16: #{tpu_custom_call.1} parent=0 // pred_region
    _
  $region17: #{tpu_custom_call.1} parent=0 // pred_fallthru
    _

</llo_original>
